<compile_context>
chip_gen: v7x
topology: tpu7x:2x2x1
jax: 0.10.0
libtpu: 0.0.40
codegen_flags: <defaults>
</compile_context>

<pallas_src>
import jax
import jax.numpy as jnp
from jax.experimental import pallas as pl
from jax.experimental.pallas import tpu as pltpu


def _identity_kernel(inps_ref, out_ref):
    out_ref[...] = inps_ref[...]


def _choose_row_tile(n: int, h: int, itemsize: int, target_block_bytes: int) -> int:
    """Pick a row tile: full (lane-dense) feature dim, sublane-dense rows,
    roughly `target_block_bytes` per block."""
    rows_for_target = max(1, target_block_bytes // max(1, h * itemsize))
    if n <= rows_for_target:
        # A single block covering the whole array: block_shape == array dims is
        # always a legal TPU block shape, regardless of (8, 128) alignment.
        return n
    # Multiple of 32 rows: sublane-dense for f32 (8), bf16 (16) and int8/fp8
    # (32), so stores are unmasked for all common dtypes.
    row_align = 32
    tile = (rows_for_target // row_align) * row_align
    return max(row_align, tile)


def node_embedder_naive(
    inps: jax.Array,
    adjacency: jax.Array | None = None,
    *,
    target_block_bytes: int = 2 * 1024 * 1024,
    alias_output: bool = False,
) -> jax.Array:
    """Pallas equivalent of NodeEmbedderNaive.forward(inps, adjacency)."""
    # adjacency is part of the module signature but is never read -- do NOT
    # feed it to pallas_call (it would otherwise be DMA'd / staged via VMEM).
    del adjacency

    n, h = inps.shape
    itemsize = jnp.dtype(inps.dtype).itemsize
    tile_n = _choose_row_tile(n, h, itemsize, target_block_bytes)
    grid = (pl.cdiv(n, tile_n),)

    # VMEM budget: input + output blocks, each double-buffered by the pipeline.
    block_bytes = tile_n * h * itemsize
    vmem_limit = min(
        64 * 1024 * 1024,
        max(32 * 1024 * 1024, 4 * block_bytes + 2 * 1024 * 1024),
    )

    return pl.pallas_call(
        _identity_kernel,
        out_shape=jax.ShapeDtypeStruct((n, h), inps.dtype),
        grid=grid,
        in_specs=[pl.BlockSpec((tile_n, h), lambda i: (i, 0))],
        out_specs=pl.BlockSpec((tile_n, h), lambda i: (i, 0)),
        # Only alias when the caller donates `inps`; otherwise XLA inserts a
        # defensive copy that doubles HBM traffic for this memory-bound op.
        input_output_aliases={0: 0} if alias_output else {},
        cost_estimate=pl.CostEstimate(
            flops=0,
            transcendentals=0,
            bytes_accessed=2 * n * h * itemsize,
        ),
        compiler_params=pltpu.CompilerParams(
            dimension_semantics=("parallel",),
            vmem_limit_bytes=vmem_limit,
        ),
    )(inps)


if __name__ == "__main__":
    key = jax.random.PRNGKey(0)
    k1, k2, k3, k4 = jax.random.split(key, 4)

    # Shapes consistent with the module: (num_nodes, hidden) node embeddings
    # and an (num_nodes, num_nodes) adjacency that the forward pass ignores.
    num_nodes, hidden = 64, 128
    inps = jax.random.normal(k1, (num_nodes, hidden), dtype=jnp.float32)
    adjacency = (jax.random.uniform(k2, (num_nodes, num_nodes)) > 0.5).astype(
        jnp.float32
    )

    # 1) Default path (single lane-dense block).
    out = jax.block_until_ready(node_embedder_naive(inps, adjacency))
    assert out.shape == inps.shape and out.dtype == inps.dtype
    assert bool(jnp.array_equal(out, inps))

    # 2) Multi-block path with a node count that does not divide the tile
    #    (pl.cdiv grid + masked edge block), f32.
    inps_f32 = jax.random.normal(k3, (50, hidden), dtype=jnp.float32)
    out_f32 = jax.block_until_ready(
        node_embedder_naive(inps_f32, None, target_block_bytes=8 * 1024)
    )
    assert bool(jnp.array_equal(out_f32, inps_f32))

    # 3) Multi-block path with bf16 (32-row tiles stay sublane-dense), and the
    #    opt-in output aliasing path exercised for correctness.
    inps_bf16 = jax.random.normal(k4, (num_nodes, hidden), dtype=jnp.bfloat16)
    out_bf16 = jax.block_until_ready(
        node_embedder_naive(
            inps_bf16, adjacency, target_block_bytes=8 * 1024, alias_output=True
        )
    )
    assert out_bf16.dtype == jnp.bfloat16
    assert bool(jnp.array_equal(out_bf16, inps_bf16))

    print("KERNEL_OK")
</pallas_src>

<mosaic_0001>
module attributes {stable_mosaic.version = 11 : i64} {
  func.func @_identity_kernel(%arg0: i32, %arg1: memref<64x128xf32, #tpu.memory_space<vmem>>, %arg2: memref<64x128xf32, #tpu.memory_space<vmem>>) attributes {dimension_semantics = [#tpu.dimension_semantics<parallel>], iteration_bounds = array<i64: 1>, scalar_prefetch = 0 : i64, scratch_operands = 0 : i64, tpu.core_type = #tpu.core_type<tc>, window_params = [{transform_indices = @transform_0, window_bounds = array<i64: 64, 128>}, {transform_indices = @transform_1, window_bounds = array<i64: 64, 128>}]} {
    %c0 = arith.constant 0 : index
    %c0_0 = arith.constant 0 : index
    %0 = vector.load %arg1[%c0, %c0_0] : memref<64x128xf32, #tpu.memory_space<vmem>>, vector<64x128xf32>
    %c0_1 = arith.constant 0 : index
    %c0_2 = arith.constant 0 : index
    %1 = vector.load %arg2[%c0_1, %c0_2] : memref<64x128xf32, #tpu.memory_space<vmem>>, vector<64x128xf32>
    tpu.vector_store %arg2[%c0_1, %c0_2], %0 {strides = array<i32>} : memref<64x128xf32, #tpu.memory_space<vmem>>, vector<64x128xf32>,
    return
  }
  func.func @transform_0(%arg0: i32) -> (i32, i32) {
    %c0_i32 = arith.constant 0 : i32
    %c0_i32_0 = arith.constant 0 : i32
    return %arg0, %c0_i32 : i32, i32
  }
  func.func @transform_1(%arg0: i32) -> (i32, i32) {
    %c0_i32 = arith.constant 0 : i32
    %c0_i32_0 = arith.constant 0 : i32
    return %arg0, %c0_i32 : i32, i32
  }
}

</mosaic_0001>

<llo_original>
// kernel: tpu_custom_call.1
$region0: #{tpu_custom_call.1}
  #allocation0 [shape = 'u32[]', space=smem, size = 0x4, offset = 0x4, fixed_abs, tag = 'smem constant byte address 0x4 - core index']
  #allocation1 [shape = 'u32[144,128]{1,0:T(1,128)}', space=vmem, size = 0x12000, scoped, tag = 'internal scratch']
  %s0 = inlined_call_operand.hbm [shape: f32[64,128], index: 0, kind: input, shape index: {}]
  %s1 = inlined_call_operand.hbm [shape: f32[64,128], index: 1, kind: output, shape index: {}]
  %s2 = sld [smem:[#allocation0]]
  $region18: #{tpu_custom_call.1} parent=0
    _
  %s4 = ssub.s32 1, %s2
  %s5 = scalar_select 0, %s4, %s2
  $region1: #{tpu_custom_call.1} parent=0
    #allocation2 [shape = 'u8[32768]{0}', space=vmem, size = 0x8000, scoped, tag = 'input window, operand 0, single buffered']
    #allocation3 [shape = 's32[1]{0}', space=sflag, size = 0x4, scoped, tag = 'scoped memory for tpu_custom_call.1']
    #allocation4 [shape = 's32[1]{0}', space=sflag, size = 0x4, scoped, tag = 'scoped memory for tpu_custom_call.1']
    #allocation5 [shape = 'u8[32768]{0}', space=vmem, size = 0x8000, scoped, tag = 'output window, operand 0, single buffered']
    %6 = vsyncpa [#allocation3], 0
    %7 = vsyncpa [#allocation4], 0
    // Predicated region
    $region2: #{tpu_custom_call.1} parent=1 // pred_check
      _
    $region3: #{tpu_custom_call.1} parent=1 // pred_check_branch
      %9 = sbr.rel (0) target = $region5
    $region4: #{tpu_custom_call.1} parent=1 // pred_region
      %s11 = ssub.s32 1024, 1024
      %12 = vsyncadd [#allocation3], %s11
      %s13 = sshll.u32 [#allocation2], 4
      %s14 = int_to_ptr.vmem [resolvable:$true] %s13
      %19 = dma.hbm_to_vmem [thread:$0]  %s0, 1024, %s14, [#allocation3], 128, 128, 8
    $region5: #{tpu_custom_call.1} parent=1 // pred_fallthru
      _
    // Predicated region
    $region6: #{tpu_custom_call.1} parent=1 // pred_check
      _
    $region7: #{tpu_custom_call.1} parent=1 // pred_check_branch
      %21 = sbr.rel (0) target = $region9
    $region8: #{tpu_custom_call.1} parent=1 // pred_region
      %22 = dma.done [#allocation3], 1024
    $region9: #{tpu_custom_call.1} parent=1 // pred_fallthru
      _
    %v23 = vld [vmem:[#allocation2] sm:$0xff]
    %v24 = vld [vmem:[#allocation2 + $0x8] sm:$0xff]
    %v25 = vld [vmem:[#allocation2 + $0x10] sm:$0xff]
    %v26 = vld [vmem:[#allocation2 + $0x18] sm:$0xff]
    %v27 = vld [vmem:[#allocation2 + $0x20] sm:$0xff]
    %v28 = vld [vmem:[#allocation2 + $0x28] sm:$0xff]
    %v29 = vld [vmem:[#allocation2 + $0x30] sm:$0xff]
    %v30 = vld [vmem:[#allocation2 + $0x38] sm:$0xff]
    %31 = vst [vmem:[#allocation5] sm:$0xff] %v23
    %32 = vst [vmem:[#allocation5 + $0x8] sm:$0xff] %v24
    %33 = vst [vmem:[#allocation5 + $0x10] sm:$0xff] %v25
    %34 = vst [vmem:[#allocation5 + $0x18] sm:$0xff] %v26
    %35 = vst [vmem:[#allocation5 + $0x20] sm:$0xff] %v27
    %36 = vst [vmem:[#allocation5 + $0x28] sm:$0xff] %v28
    %37 = vst [vmem:[#allocation5 + $0x30] sm:$0xff] %v29
    %38 = vst [vmem:[#allocation5 + $0x38] sm:$0xff] %v30
    // Predicated region
    $region10: #{tpu_custom_call.1} parent=1 // pred_check
      _
    $region11: #{tpu_custom_call.1} parent=1 // pred_check_branch
      %40 = sbr.rel (0) target = $region13
    $region12: #{tpu_custom_call.1} parent=1 // pred_region
      %s42 = ssub.s32 1024, 1024
      %43 = vsyncadd [#allocation4], %s42
      %s44 = sshll.u32 [#allocation5], 4
      %s45 = int_to_ptr.vmem [resolvable:$true] %s44
      %50 = dma.vmem_to_hbm [thread:$0]  %s45, 1024, %s1, [#allocation4], 128, 128, 8
    $region13: #{tpu_custom_call.1} parent=1 // pred_fallthru
      _
    // Predicated region
    $region14: #{tpu_custom_call.1} parent=1 // pred_check
      _
    $region15: #{tpu_custom_call.1} parent=1 // pred_check_branch
      %52 = sbr.rel (0) target = $region17
    $region16: #{tpu_custom_call.1} parent=1 // pred_region
      %53 = dma.done [#allocation4], 1024
    $region17: #{tpu_custom_call.1} parent=1 // pred_fallthru
      _
    %54 = vsyncpa [#allocation3], 1
    %55 = vsyncpa [#allocation4], 1

</llo_original>
